<compile_context>
chip_gen: v7x
topology: tpu7x:2x2x1
jax: 0.10.0
libtpu: 0.0.40
codegen_flags: <defaults>
</compile_context>

<pallas_src>
import jax
import jax.numpy as jnp
import numpy as np
from jax.experimental import pallas as pl
from jax.experimental.pallas import tpu as pltpu


def _ffn_kernel(x_ref, w1_ref, b1_ref, w2_ref, b2_ref, o_ref, acc_ref):
    """One (row-tile, hidden-tile) grid step of relu(x@W1 + b1) @ W2 + b2."""
    k = pl.program_id(1)

    @pl.when(k == 0)
    def _init():
        # Fold the fc2 bias into the accumulator init (saves a separate
        # full (tm, d_model) VPU pass in the epilogue).
        acc_ref[...] = jnp.broadcast_to(
            b2_ref[...], acc_ref.shape).astype(jnp.float32)

    # fc1 hidden-chunk (+ bias) and ReLU; f32 accumulation on the MXU.
    h = jnp.dot(x_ref[...], w1_ref[...], preferred_element_type=jnp.float32)
    h = jnp.maximum(h + b1_ref[...].astype(jnp.float32), 0.0)
    # TODO(synk): dropout is identity (eval mode); training-mode masking not implemented.
    # fc2 hidden-chunk, accumulated into the f32 scratch.
    acc_ref[...] += jnp.dot(h.astype(w2_ref.dtype), w2_ref[...],
                            preferred_element_type=jnp.float32)

    @pl.when(k == pl.num_programs(1) - 1)
    def _finalize():
        o_ref[...] = acc_ref[...].astype(o_ref.dtype)


def _pick_hidden_tile(d_hidden, target):
    """Largest multiple of 128 that divides d_hidden and is <= target.

    Falls back to the full hidden width if no such divisor exists (keeps the
    lane-dim (128) tiling constraint satisfied without padding weights)."""
    if d_hidden <= target or d_hidden % 128 != 0:
        return d_hidden
    t = min((target // 128) * 128, d_hidden)
    while t >= 128:
        if d_hidden % t == 0:
            return t
        t -= 128
    return d_hidden


def _pick_row_tile(n_rows, block_rows):
    """Row tile: multiple of 8 (or full extent), >= 2 grid steps when possible."""
    if n_rows < 16:
        return n_rows                      # full-extent single block
    if n_rows >= 2 * block_rows:
        return block_rows
    # Split into exactly two row blocks so both v7x TensorCores get work.
    half = (n_rows + 1) // 2
    return max(8, ((half + 7) // 8) * 8)


def feedforward_layer(x, params, *, block_rows=256, block_hidden=512):
    """y = relu(x @ W1 + b1) @ W2 + b2  (dropout in eval mode == identity).

    x: (..., d_model). Weights are pre-transposed: W1 (d_model, d_hidden),
    W2 (d_hidden, d_model); biases are (1, d_out).
    """
    w1, b1, w2, b2 = params
    d_model = x.shape[-1]
    d_hidden = w1.shape[-1]

    orig_shape = x.shape
    x2 = x.reshape(-1, d_model)            # lane-dense 2-D slab of rows
    n_rows = x2.shape[0]

    tm = _pick_row_tile(n_rows, block_rows)
    tk = _pick_hidden_tile(d_hidden, block_hidden)
    grid = (pl.cdiv(n_rows, tm), d_hidden // tk)   # rows parallel, hidden reduction last

    # Explicit scoped-VMEM budget: double-buffered weight/bias + activation
    # tiles plus the f32 accumulator, with 2x headroom (defaults are 16/32 MiB).
    itemsize = np.dtype(x.dtype).itemsize
    weight_bytes = 2 * (d_model * tk + tk + tk * d_model + d_model) * itemsize
    act_bytes = 2 * 2 * tm * d_model * itemsize
    acc_bytes = tm * d_model * 4
    vmem_limit = int(min(max(2 * (weight_bytes + act_bytes + acc_bytes), 4 << 20),
                         64 << 20))

    cost = pl.CostEstimate(
        flops=4 * n_rows * d_model * d_hidden,
        transcendentals=0,
        bytes_accessed=(2 * n_rows * d_model          # x in + y out
                        + 2 * d_model * d_hidden      # W1 + W2
                        + d_hidden + d_model) * itemsize)

    out2 = pl.pallas_call(
        _ffn_kernel,
        out_shape=jax.ShapeDtypeStruct((n_rows, d_model), x.dtype),
        grid_spec=pltpu.PrefetchScalarGridSpec(
            num_scalar_prefetch=0,
            grid=grid,
            in_specs=[
                pl.BlockSpec((tm, d_model), lambda i, k: (i, 0)),    # x rows
                pl.BlockSpec((d_model, tk), lambda i, k: (0, k)),    # W1 chunk
                pl.BlockSpec((1, tk), lambda i, k: (0, k)),          # b1 chunk
                pl.BlockSpec((tk, d_model), lambda i, k: (k, 0)),    # W2 chunk
                pl.BlockSpec((1, d_model), lambda i, k: (0, 0)),     # b2
            ],
            out_specs=pl.BlockSpec((tm, d_model), lambda i, k: (i, 0)),
            scratch_shapes=[pltpu.VMEM((tm, d_model), jnp.float32)],
        ),
        compiler_params=pltpu.CompilerParams(
            dimension_semantics=("parallel", "arbitrary"),
            vmem_limit_bytes=vmem_limit),
        cost_estimate=cost,
    )(x2, w1, b1, w2, b2)

    return out2.reshape(orig_shape)


def reference_ffn(x, params):
    """Pure-JAX reference mirroring the PyTorch module (eval mode)."""
    w1, b1, w2, b2 = params
    h = jnp.maximum(x @ w1 + b1[0], 0.0)
    return h @ w2 + b2[0]


def init_params(key, d_model, d_hidden, dtype=jnp.float32):
    """nn.Linear-style init; weights stored pre-transposed as (d_in, d_out)."""
    k1, k2, k3, k4 = jax.random.split(key, 4)
    s1 = 1.0 / np.sqrt(d_model)
    s2 = 1.0 / np.sqrt(d_hidden)
    w1 = jax.random.uniform(k1, (d_model, d_hidden), dtype, -s1, s1)
    b1 = jax.random.uniform(k2, (1, d_hidden), dtype, -s1, s1)
    w2 = jax.random.uniform(k3, (d_hidden, d_model), dtype, -s2, s2)
    b2 = jax.random.uniform(k4, (1, d_model), dtype, -s2, s2)
    return (w1, b1, w2, b2)


if __name__ == "__main__":
    # Small shapes, but chosen so the demo exercises both grid axes:
    # 16 rows -> 2 row blocks of 8; d_hidden=256 with block_hidden=128 -> 2
    # hidden-reduction steps (accumulator init / finalize paths).
    B, S, d_model, d_hidden = 2, 8, 32, 256

    root = jax.random.PRNGKey(0)
    kx, kp = jax.random.split(root, 2)
    x = jax.random.normal(kx, (B, S, d_model), jnp.float32)
    params = init_params(kp, d_model, d_hidden)

    out = feedforward_layer(x, params, block_rows=256, block_hidden=128)
    out = jax.block_until_ready(out)

    ref = reference_ffn(x, params)
    np.testing.assert_allclose(np.asarray(out), np.asarray(ref),
                               rtol=1e-4, atol=1e-4)

    print("KERNEL_OK")
</pallas_src>

<mosaic_0001>
module attributes {stable_mosaic.version = 11 : i64} {
  func.func @_ffn_kernel(%arg0: i32, %arg1: i32, %arg2: memref<8x32xf32, #tpu.memory_space<vmem>>, %arg3: memref<32x128xf32, #tpu.memory_space<vmem>>, %arg4: memref<1x128xf32, #tpu.memory_space<vmem>>, %arg5: memref<128x32xf32, #tpu.memory_space<vmem>>, %arg6: memref<1x32xf32, #tpu.memory_space<vmem>>, %arg7: memref<8x32xf32, #tpu.memory_space<vmem>>, %arg8: memref<8x32xf32, #tpu.memory_space<vmem>>) attributes {dimension_semantics = [#tpu.dimension_semantics<parallel>, #tpu.dimension_semantics<arbitrary>], iteration_bounds = array<i64: 2, 2>, scalar_prefetch = 0 : i64, scratch_operands = 1 : i64, tpu.core_type = #tpu.core_type<tc>, window_params = [{transform_indices = @transform_0, window_bounds = array<i64: 8, 32>}, {transform_indices = @transform_1, window_bounds = array<i64: 32, 128>}, {transform_indices = @transform_2, window_bounds = array<i64: 1, 128>}, {transform_indices = @transform_3, window_bounds = array<i64: 128, 32>}, {pipeline_mode = #tpu.pipeline_mode<synchronous>, transform_indices = @transform_4, window_bounds = array<i64: 1, 32>}, {transform_indices = @transform_5, window_bounds = array<i64: 8, 32>}]} {
    %c0_i32 = arith.constant 0 : i32
    %0 = arith.cmpi eq, %arg1, %c0_i32 : i32
    %1 = arith.extui %0 : i1 to i32
    %c0_i32_0 = arith.constant 0 : i32
    %2 = arith.cmpi ne, %1, %c0_i32_0 : i32
    scf.if %2 {
      %c0_15 = arith.constant 0 : index
      %c0_16 = arith.constant 0 : index
      %19 = vector.load %arg6[%c0_15, %c0_16] : memref<1x32xf32, #tpu.memory_space<vmem>>, vector<1x32xf32>
      %20 = vector.shape_cast %19 : vector<1x32xf32> to vector<1x32xf32>
      %21 = vector.broadcast %20 : vector<1x32xf32> to vector<8x32xf32>
      %c0_17 = arith.constant 0 : index
      %c0_18 = arith.constant 0 : index
      %22 = vector.load %arg8[%c0_17, %c0_18] : memref<8x32xf32, #tpu.memory_space<vmem>>, vector<8x32xf32>
      tpu.vector_store %arg8[%c0_17, %c0_18], %21 {strides = array<i32>} : memref<8x32xf32, #tpu.memory_space<vmem>>, vector<8x32xf32>,
    } else {
    }
    %c0 = arith.constant 0 : index
    %c0_1 = arith.constant 0 : index
    %3 = vector.load %arg2[%c0, %c0_1] : memref<8x32xf32, #tpu.memory_space<vmem>>, vector<8x32xf32>
    %c0_2 = arith.constant 0 : index
    %c0_3 = arith.constant 0 : index
    %4 = vector.load %arg3[%c0_2, %c0_3] : memref<32x128xf32, #tpu.memory_space<vmem>>, vector<32x128xf32>
    %cst = arith.constant dense<0.000000e+00> : vector<8x128xf32>
    %5 = tpu.matmul %3, %4, %cst {dimension_numbers = #tpu.dot_dimension_numbers<[1], [0], [0], [1], [0, 0, 1, 1], [], []>} : vector<8x32xf32>, vector<32x128xf32>, vector<8x128xf32> -> vector<8x128xf32>
    %c0_4 = arith.constant 0 : index
    %c0_5 = arith.constant 0 : index
    %6 = vector.load %arg4[%c0_4, %c0_5] : memref<1x128xf32, #tpu.memory_space<vmem>>, vector<1x128xf32>
    %7 = vector.broadcast %6 : vector<1x128xf32> to vector<8x128xf32>
    %8 = arith.addf %5, %7 : vector<8x128xf32>
    %cst_6 = arith.constant 0.000000e+00 : f32
    %9 = vector.broadcast %cst_6 : f32 to vector<8x128xf32>
    %10 = arith.maximumf %8, %9 : vector<8x128xf32>
    %c0_7 = arith.constant 0 : index
    %c0_8 = arith.constant 0 : index
    %11 = vector.load %arg8[%c0_7, %c0_8] : memref<8x32xf32, #tpu.memory_space<vmem>>, vector<8x32xf32>
    %c0_9 = arith.constant 0 : index
    %c0_10 = arith.constant 0 : index
    %12 = vector.load %arg5[%c0_9, %c0_10] : memref<128x32xf32, #tpu.memory_space<vmem>>, vector<128x32xf32>
    %cst_11 = arith.constant dense<0.000000e+00> : vector<8x32xf32>
    %13 = tpu.matmul %10, %12, %cst_11 {dimension_numbers = #tpu.dot_dimension_numbers<[1], [0], [0], [1], [0, 0, 1, 1], [], []>} : vector<8x128xf32>, vector<128x32xf32>, vector<8x32xf32> -> vector<8x32xf32>
    %14 = arith.addf %11, %13 : vector<8x32xf32>
    %c0_12 = arith.constant 0 : index
    %c0_13 = arith.constant 0 : index
    %15 = vector.load %arg8[%c0_12, %c0_13] : memref<8x32xf32, #tpu.memory_space<vmem>>, vector<8x32xf32>
    tpu.vector_store %arg8[%c0_12, %c0_13], %14 {strides = array<i32>} : memref<8x32xf32, #tpu.memory_space<vmem>>, vector<8x32xf32>,
    %c1_i32 = arith.constant 1 : i32
    %16 = arith.cmpi eq, %arg1, %c1_i32 : i32
    %17 = arith.extui %16 : i1 to i32
    %c0_i32_14 = arith.constant 0 : i32
    %18 = arith.cmpi ne, %17, %c0_i32_14 : i32
    scf.if %18 {
      %c0_15 = arith.constant 0 : index
      %c0_16 = arith.constant 0 : index
      %19 = vector.load %arg8[%c0_15, %c0_16] : memref<8x32xf32, #tpu.memory_space<vmem>>, vector<8x32xf32>
      %c0_17 = arith.constant 0 : index
      %c0_18 = arith.constant 0 : index
      %20 = vector.load %arg7[%c0_17, %c0_18] : memref<8x32xf32, #tpu.memory_space<vmem>>, vector<8x32xf32>
      tpu.vector_store %arg7[%c0_17, %c0_18], %19 {strides = array<i32>} : memref<8x32xf32, #tpu.memory_space<vmem>>, vector<8x32xf32>,
    } else {
    }
    return
  }
  func.func @transform_0(%arg0: i32, %arg1: i32) -> (i32, i32) {
    %c0_i32 = arith.constant 0 : i32
    %c0_i32_0 = arith.constant 0 : i32
    return %arg0, %c0_i32 : i32, i32
  }
  func.func @transform_1(%arg0: i32, %arg1: i32) -> (i32, i32) {
    %c0_i32 = arith.constant 0 : i32
    %c0_i32_0 = arith.constant 0 : i32
    return %c0_i32, %arg1 : i32, i32
  }
  func.func @transform_2(%arg0: i32, %arg1: i32) -> (i32, i32) {
    %c0_i32 = arith.constant 0 : i32
    %c0_i32_0 = arith.constant 0 : i32
    return %c0_i32, %arg1 : i32, i32
  }
  func.func @transform_3(%arg0: i32, %arg1: i32) -> (i32, i32) {
    %c0_i32 = arith.constant 0 : i32
    %c0_i32_0 = arith.constant 0 : i32
    return %arg1, %c0_i32 : i32, i32
  }
  func.func @transform_4(%arg0: i32, %arg1: i32) -> (i32, i32) {
    %c0_i32 = arith.constant 0 : i32
    %c0_i32_0 = arith.constant 0 : i32
    %c0_i32_1 = arith.constant 0 : i32
    return %c0_i32, %c0_i32_0 : i32, i32
  }
  func.func @transform_5(%arg0: i32, %arg1: i32) -> (i32, i32) {
    %c0_i32 = arith.constant 0 : i32
    %c0_i32_0 = arith.constant 0 : i32
    return %arg0, %c0_i32 : i32, i32
  }
}

</mosaic_0001>

<llo_original>
// kernel: tpu_custom_call.1
$region0: #{tpu_custom_call.1}
  #allocation0 [shape = 'u32[]', space=smem, size = 0x4, offset = 0x4, fixed_abs, tag = 'smem constant byte address 0x4 - core index']
  #allocation1 [shape = 'u32[144,128]{1,0:T(1,128)}', space=vmem, size = 0x12000, scoped, tag = 'internal scratch']
  #allocation2 [shape = 'f32[8,32]{1,0:T(8,128)}', space=vmem, size = 0x1000, scoped, tag = 'scratch operand']
  %s0 = inlined_call_operand.vmem [shape: f32[16,32], index: 0, kind: input, shape index: {}]
  %s1 = inlined_call_operand.vmem [shape: f32[32,256], index: 1, kind: input, shape index: {}]
  %s2 = inlined_call_operand.vmem [shape: f32[1,256], index: 2, kind: input, shape index: {}]
  %s3 = inlined_call_operand.vmem [shape: f32[256,32], index: 3, kind: input, shape index: {}]
  %s4 = inlined_call_operand.vmem [shape: f32[1,32], index: 4, kind: input, shape index: {}]
  %s5 = inlined_call_operand.hbm [shape: f32[16,32], index: 5, kind: output, shape index: {}]
  %s6 = sld [smem:[#allocation0]]
  $region99: #{tpu_custom_call.1} parent=0
    _
  %s8 = ssub.s32 1, %s6
  %s9 = scalar_select 0, %s8, %s6
  $region1: #{tpu_custom_call.1} parent=0
    #allocation3 [shape = 'u8[32768]{0}', space=vmem, size = 0x8000, scoped, tag = 'input window, operand 1']
    #allocation4 [shape = 'u8[8192]{0}', space=vmem, size = 0x2000, scoped, tag = 'output window, operand 0']
    #allocation5 [shape = 's32[2]{0}', space=sflag, size = 0x8, scoped, tag = 'scoped memory for tpu_custom_call.1']
    %10 = vsyncpa [#allocation5], 0
    %s11 = scalar_lea.sflag [#allocation5], 1
    %12 = vsyncpa %s11, 0
    loop: start=0, step=1, limit=6
    $region2: #{tpu_custom_call.1} parent=1 // loop_pre_header
      _
    $region3: #{tpu_custom_call.1} parent=1 // loop_header
      %s14 = sphi 0, %s18
      %p15 = scmp.ge.s32.totalorder %s14, 6
      %s21 = sphi 0, %s33
      %s22 = sphi 0, %s29
      %s23 = sphi 0, %s21
      %s24 = sphi 0, %s22
      %s25 = sphi 0, %s23
      %s26 = sphi 0, %s24
      %s36 = sphi 0, %s38
      %s39 = sphi 0, %s36
      %s40 = sphi 0, %s39
      %s56 = sphi 0, %s40
      %s62 = sphi 0, %s64
      %s65 = sphi 0, %s62
      %s66 = sphi 0, %s65
      %s82 = sphi 0, %s66
      %s88 = sphi 0, %s90
      %s91 = sphi 0, %s88
      %s92 = sphi 0, %s91
      %s108 = sphi 0, %s92
      %s114 = sphi 0, %s116
      %s117 = sphi 0, %s114
      %s118 = sphi 0, %s117
      %s134 = sphi 0, %s118
      %s138 = sphi 0, %s138
      %s140 = sphi 0, %s138
      %s141 = sphi 0, %s140
      %s155 = sphi 0, %s141
      %s161 = sphi 0, %s163
      %s164 = sphi 0, %s161
      %s165 = sphi 0, %s164
      %s181 = sphi 0, %s165
    $region4: #{tpu_custom_call.1} parent=1 // loop_header_branch
      %17 = sbr.rel (%p15) target = $region8
    $region5: #{tpu_custom_call.1} parent=1 // loop_body
      %s19 = ssub.s32 %s14, 1
      %s20 = ssub.s32 %s14, 2
      %s27 = sadd.s32 1, %s22
      %p28 = scmp.ge.s32.totalorder %s27, 2
      %s29 = scalar_select %p28, 0, %s27
      %s30 = sadd.s32 1, %s21
      %s31 = scalar_select %p28, %s30, %s21
      %p32 = scmp.ge.s32.totalorder %s31, 2
      %s33 = scalar_select %p32, 0, %s31
      %s34 = ssub.s32 %s21, %s33
      %p35 = scmp.eq.s32.totalorder %s34, 0
      %s37 = sadd.s32 %s36, 1
      %s38 = scalar_select %p35, %s36, %s37
      %p41 = pneg %p35
      %p42 = scmp.eq.s32.totalorder %s14, 3
      %p43 = por %p41, %p42
      %p44 = scmp.ne.s32.totalorder %s36, %s39
      %p45 = scmp.eq.s32.totalorder %s14, 0
      %p46 = por %p44, %p45
      %p47 = scmp.ne.s32.totalorder %s36, %s39
      %p48 = scmp.eq.s32.totalorder %s19, 3
      %p49 = por %p47, %p48
      %p50 = scmp.ne.s32.totalorder %s39, %s40
      %p51 = scmp.eq.s32.totalorder %s19, 0
      %p52 = por %p50, %p51
      %p53 = scmp.ne.s32.totalorder %s39, %s40
      %p54 = scmp.eq.s32.totalorder %s20, 3
      %p55 = por %p53, %p54
      %p57 = scmp.ne.s32.totalorder %s40, %s56
      %p58 = scmp.eq.s32.totalorder %s20, 0
      %p59 = por %p57, %p58
      %s60 = ssub.s32 %s22, %s29
      %p61 = scmp.eq.s32.totalorder %s60, 0
      %s63 = sadd.s32 %s62, 1
      %s64 = scalar_select %p61, %s62, %s63
      %p67 = pneg %p61
      %p68 = scmp.eq.s32.totalorder %s14, 3
      %p69 = por %p67, %p68
      %p70 = scmp.ne.s32.totalorder %s62, %s65
      %p71 = scmp.eq.s32.totalorder %s14, 0
      %p72 = por %p70, %p71
      %p73 = scmp.ne.s32.totalorder %s62, %s65
      %p74 = scmp.eq.s32.totalorder %s19, 3
      %p75 = por %p73, %p74
      %p76 = scmp.ne.s32.totalorder %s65, %s66
      %p77 = scmp.eq.s32.totalorder %s19, 0
      %p78 = por %p76, %p77
      %p79 = scmp.ne.s32.totalorder %s65, %s66
      %p80 = scmp.eq.s32.totalorder %s20, 3
      %p81 = por %p79, %p80
      %p83 = scmp.ne.s32.totalorder %s66, %s82
      %p84 = scmp.eq.s32.totalorder %s20, 0
      %p85 = por %p83, %p84
      %s86 = ssub.s32 %s22, %s29
      %p87 = scmp.eq.s32.totalorder %s86, 0
      %s89 = sadd.s32 %s88, 1
      %s90 = scalar_select %p87, %s88, %s89
      %p93 = pneg %p87
      %p94 = scmp.eq.s32.totalorder %s14, 3
      %p95 = por %p93, %p94
      %p96 = scmp.ne.s32.totalorder %s88, %s91
      %p97 = scmp.eq.s32.totalorder %s14, 0
      %p98 = por %p96, %p97
      %p99 = scmp.ne.s32.totalorder %s88, %s91
      %p100 = scmp.eq.s32.totalorder %s19, 3
      %p101 = por %p99, %p100
      %p102 = scmp.ne.s32.totalorder %s91, %s92
      %p103 = scmp.eq.s32.totalorder %s19, 0
      %p104 = por %p102, %p103
      %p105 = scmp.ne.s32.totalorder %s91, %s92
      %p106 = scmp.eq.s32.totalorder %s20, 3
      %p107 = por %p105, %p106
      %p109 = scmp.ne.s32.totalorder %s92, %s108
      %p110 = scmp.eq.s32.totalorder %s20, 0
      %p111 = por %p109, %p110
      %s112 = ssub.s32 %s22, %s29
      %p113 = scmp.eq.s32.totalorder %s112, 0
      %s115 = sadd.s32 %s114, 1
      %s116 = scalar_select %p113, %s114, %s115
      %p119 = pneg %p113
      %p120 = scmp.eq.s32.totalorder %s14, 3
      %p121 = por %p119, %p120
      %p122 = scmp.ne.s32.totalorder %s114, %s117
      %p123 = scmp.eq.s32.totalorder %s14, 0
      %p124 = por %p122, %p123
      %p125 = scmp.ne.s32.totalorder %s114, %s117
      %p126 = scmp.eq.s32.totalorder %s19, 3
      %p127 = por %p125, %p126
      %p128 = scmp.ne.s32.totalorder %s117, %s118
      %p129 = scmp.eq.s32.totalorder %s19, 0
      %p130 = por %p128, %p129
      %p131 = scmp.ne.s32.totalorder %s117, %s118
      %p132 = scmp.eq.s32.totalorder %s20, 3
      %p133 = por %p131, %p132
      %p135 = scmp.ne.s32.totalorder %s118, %s134
      %p136 = scmp.eq.s32.totalorder %s20, 0
      %p137 = por %p135, %p136
      %s139 = sadd.s32 %s138, 1
      %p142 = scmp.eq.s32.totalorder %s14, 3
      %p143 = scmp.ne.s32.totalorder %s138, %s140
      %p144 = scmp.eq.s32.totalorder %s14, 0
      %p145 = por %p143, %p144
      %p146 = scmp.ne.s32.totalorder %s138, %s140
      %p147 = scmp.eq.s32.totalorder %s19, 3
      %p148 = por %p146, %p147
      %p149 = scmp.ne.s32.totalorder %s140, %s141
      %p150 = scmp.eq.s32.totalorder %s19, 0
      %p151 = por %p149, %p150
      %p152 = scmp.ne.s32.totalorder %s140, %s141
      %p153 = scmp.eq.s32.totalorder %s20, 3
      %p154 = por %p152, %p153
      %p156 = scmp.ne.s32.totalorder %s141, %s155
      %p157 = scmp.eq.s32.totalorder %s20, 0
      %p158 = por %p156, %p157
      %s159 = ssub.s32 %s21, %s33
      %p160 = scmp.eq.s32.totalorder %s159, 0
      %s162 = sadd.s32 %s161, 1
      %s163 = scalar_select %p160, %s161, %s162
      %p166 = pneg %p160
      %p167 = scmp.eq.s32.totalorder %s14, 3
      %p168 = por %p166, %p167
      %p169 = scmp.ne.s32.totalorder %s161, %s164
      %p170 = scmp.eq.s32.totalorder %s14, 0
      %p171 = por %p169, %p170
      %p172 = scmp.ne.s32.totalorder %s161, %s164
      %p173 = scmp.eq.s32.totalorder %s19, 3
      %p174 = por %p172, %p173
      %p175 = scmp.ne.s32.totalorder %s164, %s165
      %p176 = scmp.eq.s32.totalorder %s19, 0
      %p177 = por %p175, %p176
      %p178 = scmp.ne.s32.totalorder %s164, %s165
      %p179 = scmp.eq.s32.totalorder %s20, 3
      %p180 = por %p178, %p179
      %p182 = scmp.ne.s32.totalorder %s165, %s181
      %p183 = scmp.eq.s32.totalorder %s20, 0
      %p184 = por %p182, %p183
      %p185 = scmp.le.s32.totalorder 1, %s14
      %p186 = scmp.lt.s32.totalorder %s14, 5
      %p187 = pnand %p185, %p186
      %p188 = pneg %p187
      // Predicated region
      $region9: #{tpu_custom_call.1} parent=5 // pred_check
        _
      $region10: #{tpu_custom_call.1} parent=5 // pred_check_branch
        %190 = sbr.rel (%p187) target = $region12
      $region11: #{tpu_custom_call.1} parent=5 // pred_region
        %s191 = ssub.s32 %s14, 1
        // Predicated region
        $region13: #{tpu_custom_call.1} parent=11 // pred_check
          %p192 = pneg %p151
        $region14: #{tpu_custom_call.1} parent=11 // pred_check_branch
          %194 = sbr.rel (%p192) target = $region16
        $region15: #{tpu_custom_call.1} parent=11 // pred_region
          _
        $region16: #{tpu_custom_call.1} parent=11 // pred_fallthru
          _
      $region12: #{tpu_custom_call.1} parent=5 // pred_fallthru
        _
      %p195 = scmp.lt.s32.totalorder %s14, 4
      // Predicated region
      $region17: #{tpu_custom_call.1} parent=5 // pred_check
        %p196 = pneg %p195
      $region18: #{tpu_custom_call.1} parent=5 // pred_check_branch
        %198 = sbr.rel (%p196) target = $region20
      $region19: #{tpu_custom_call.1} parent=5 // pred_region
        // Predicated region
        $region21: #{tpu_custom_call.1} parent=19 // pred_check
          %p199 = pneg %p46
        $region22: #{tpu_custom_call.1} parent=19 // pred_check_branch
          %201 = sbr.rel (%p199) target = $region24
        $region23: #{tpu_custom_call.1} parent=19 // pred_region
          %p202 = scmp.lt.s32.totalorder %s21, 1
          %s203 = scalar_select %p202, %s21, 1
          %s204 = smul.addr %s203, 8
          %s205 = scalar_lea.vmem %s0, %s204
        $region24: #{tpu_custom_call.1} parent=19 // pred_fallthru
          _
        // Predicated region
        $region25: #{tpu_custom_call.1} parent=19 // pred_check
          %p206 = pneg %p72
        $region26: #{tpu_custom_call.1} parent=19 // pred_check_branch
          %208 = sbr.rel (%p206) target = $region28
        $region27: #{tpu_custom_call.1} parent=19 // pred_region
          %s209 = sand.u32 %s62, 1
          %s210 = sand.u32 %s62, 1
          %s211 = smul.addr %s210, 32
          %s212 = scalar_lea.vmem [#allocation3], %s211
          %s213 = smul.addr %s22, 8
          %s214 = scalar_lea.vmem %s1, %s213
          // Predicated region
          $region29: #{tpu_custom_call.1} parent=27 // pred_check
            _
          $region30: #{tpu_custom_call.1} parent=27 // pred_check_branch
            %216 = sbr.rel (0) target = $region32
          $region31: #{tpu_custom_call.1} parent=27 // pred_region
            // Predicated region
            $region33: #{tpu_custom_call.1} parent=31 // pred_check
              _
            $region34: #{tpu_custom_call.1} parent=31 // pred_check_branch
              %218 = sbr.rel (0) target = $region36
            $region35: #{tpu_custom_call.1} parent=31 // pred_region
              // Predicated region
              $region48: #{tpu_custom_call.1} parent=35 // pred_check
                _
              $region49: #{tpu_custom_call.1} parent=35 // pred_check_branch
                %239 = sbr.rel (0) target = $region51
              $region50: #{tpu_custom_call.1} parent=35 // pred_region
                loop: start=0, step=1, limit=1
                $region52: #{tpu_custom_call.1} parent=50 // loop_pre_header
                  _
                $region53: #{tpu_custom_call.1} parent=50 // loop_header
                  %s241 = sphi 0, %s245
                  %p242 = scmp.ge.s32.totalorder %s241, 1
                  %s246 = sphi %s214, %s214
                  %s247 = sphi %s212, %s212
                $region54: #{tpu_custom_call.1} parent=50 // loop_header_branch
                  %244 = sbr.rel (%p242) target = $region58
                $region55: #{tpu_custom_call.1} parent=50 // loop_body
                  %v248 = vld [vmem:[%s246] sm:$0xff]
                  %249 = vst [vmem:[%s247] sm:$0xff] %v248
                  %v250 = vld [vmem:[%s246 + $0x10] sm:$0xff]
                  %251 = vst [vmem:[%s247 + $0x8] sm:$0xff] %v250
                  %v252 = vld [vmem:[%s246 + $0x20] sm:$0xff]
                  %253 = vst [vmem:[%s247 + $0x10] sm:$0xff] %v252
                  %v254 = vld [vmem:[%s246 + $0x30] sm:$0xff]
                  %255 = vst [vmem:[%s247 + $0x18] sm:$0xff] %v254
                $region56: #{tpu_custom_call.1} parent=50 // loop_footer
                  %s245 = sadd.s32 1, %s241
                $region57: #{tpu_custom_call.1} parent=50 // loop_footer_branch
                  %240 = sbr.rel target = $region53
                $region58: #{tpu_custom_call.1} parent=50 // loop_exit
                  _
              $region51: #{tpu_custom_call.1} parent=35 // pred_fallthru
                _
              // Predicated region
              $region59: #{tpu_custom_call.1} parent=35 // pred_check
                _
              $region60: #{tpu_custom_call.1} parent=35 // pred_check_branch
                %257 = sbr.rel target = $region62
              $region61: #{tpu_custom_call.1} parent=35 // pred_region
                _
              $region62: #{tpu_custom_call.1} parent=35 // pred_fallthru
                _
            $region36: #{tpu_custom_call.1} parent=31 // pred_fallthru
              _
            // Predicated region
            $region37: #{tpu_custom_call.1} parent=31 // pred_check
              _
            $region38: #{tpu_custom_call.1} parent=31 // pred_check_branch
              %220 = sbr.rel target = $region40
            $region39: #{tpu_custom_call.1} parent=31 // pred_region
              loop: start=0, step=1, limit=1
              $region41: #{tpu_custom_call.1} parent=39 // loop_pre_header
                _
              $region42: #{tpu_custom_call.1} parent=39 // loop_header
                %s223 = sphi 0, %s227
                %p224 = scmp.ge.s32.totalorder %s223, 1
                %s228 = sphi %s214, %s214
                %s229 = sphi %s212, %s212
              $region43: #{tpu_custom_call.1} parent=39 // loop_header_branch
                %226 = sbr.rel (%p224) target = $region47
              $region44: #{tpu_custom_call.1} parent=39 // loop_body
                %v230 = vld [vmem:[%s228] sm:$0xff]
                %231 = vst [vmem:[%s229] sm:$0xff] %v230
                %v232 = vld [vmem:[%s228 + $0x10] sm:$0xff]
                %233 = vst [vmem:[%s229 + $0x8] sm:$0xff] %v232
                %v234 = vld [vmem:[%s228 + $0x20] sm:$0xff]
                %235 = vst [vmem:[%s229 + $0x10] sm:$0xff] %v234
                %v236 = vld [vmem:[%s228 + $0x30] sm:$0xff]
                %237 = vst [vmem:[%s229 + $0x18] sm:$0xff] %v236
              $region45: #{tpu_custom_call.1} parent=39 // loop_footer
                %s227 = sadd.s32 1, %s223
              $region46: #{tpu_custom_call.1} parent=39 // loop_footer_branch
                %222 = sbr.rel target = $region42
              $region47: #{tpu_custom_call.1} parent=39 // loop_exit
                _
            $region40: #{tpu_custom_call.1} parent=31 // pred_fallthru
              _
          $region32: #{tpu_custom_call.1} parent=27 // pred_fallthru
            _
          %258 = vnop
        $region28: #{tpu_custom_call.1} parent=19 // pred_fallthru
          _
        // Predicated region
        $region63: #{tpu_custom_call.1} parent=19 // pred_check
          %p259 = pneg %p98
        $region64: #{tpu_custom_call.1} parent=19 // pred_check_branch
          %261 = sbr.rel (%p259) target = $region66
        $region65: #{tpu_custom_call.1} parent=19 // pred_region
          %p262 = scmp.lt.s32.totalorder %s22, 1
          %s263 = scalar_select %p262, %s22, 1
          %s264 = scalar_lea.vmem %s2, %s263
        $region66: #{tpu_custom_call.1} parent=19 // pred_fallthru
          _
        // Predicated region
        $region67: #{tpu_custom_call.1} parent=19 // pred_check
          %p265 = pneg %p124
        $region68: #{tpu_custom_call.1} parent=19 // pred_check_branch
          %267 = sbr.rel (%p265) target = $region70
        $region69: #{tpu_custom_call.1} parent=19 // pred_region
          %s268 = smul.u32 16, %s22
          %p269 = scmp.lt.s32.totalorder %s268, 31
          %s270 = scalar_select %p269, %s268, 31
          %s271 = smul.addr %s270, 8
          %s272 = scalar_lea.vmem %s3, %s271
          %s273 = smul.u32 16, %s22
        $region70: #{tpu_custom_call.1} parent=19 // pred_fallthru
          _
      $region20: #{tpu_custom_call.1} parent=5 // pred_fallthru
        _
      %p274 = scmp.le.s32.totalorder 1, %s14
      %p275 = scmp.lt.s32.totalorder %s14, 5
      %p276 = pnand %p274, %p275
      %p277 = pneg %p276
      // Predicated region
      $region71: #{tpu_custom_call.1} parent=5 // pred_check
        _
      $region72: #{tpu_custom_call.1} parent=5 // pred_check_branch
        %279 = sbr.rel (%p276) target = $region74
      $region73: #{tpu_custom_call.1} parent=5 // pred_region
        %s280 = ssub.s32 %s14, 1
        %s281 = sand.u32 %s65, 1
        %s282 = sand.u32 %s65, 1
        %s283 = smul.addr %s282, 32
        %s284 = scalar_lea.vmem [#allocation3], %s283
        // Predicated region
        $region75: #{tpu_custom_call.1} parent=73 // pred_check
          %p285 = pneg %p78
        $region76: #{tpu_custom_call.1} parent=73 // pred_check_branch
          %287 = sbr.rel (%p285) target = $region78
        $region77: #{tpu_custom_call.1} parent=73 // pred_region
          _
        $region78: #{tpu_custom_call.1} parent=73 // pred_fallthru
          _
        %p288 = scmp.lt.s32.totalorder %s23, 1
        %s289 = scalar_select %p288, %s23, 1
        %s290 = smul.addr %s289, 8
        %s291 = scalar_lea.vmem %s0, %s290
        %p292 = pneg %p52
        %p293 = pneg %p49
        %s294 = sand.u32 %s65, 1
        %s295 = sand.u32 %s65, 1
        %s296 = smul.addr %s295, 32
        %s297 = scalar_lea.vmem [#allocation3], %s296
        %p298 = pneg %p78
        %p299 = pneg %p75
        %p300 = scmp.lt.s32.totalorder %s24, 1
        %s301 = scalar_select %p300, %s24, 1
        %s302 = scalar_lea.vmem %s2, %s301
        %p303 = pneg %p104
        %p304 = pneg %p101
        %s305 = smul.u32 16, %s24
        %p306 = scmp.lt.s32.totalorder %s305, 31
        %s307 = scalar_select %p306, %s305, 31
        %s308 = smul.addr %s307, 8
        %s309 = scalar_lea.vmem %s3, %s308
        %p310 = pneg %p130
        %p311 = pneg %p127
        %p312 = pneg %p151
        %p313 = pneg %p148
        %p314 = pneg %p177
        %p315 = pneg %p174
        %s316 = sand.u32 %s164, 1
        %s317 = scalar_lea.sflag [#allocation5], %s316
        %s318 = sand.u32 %s164, 1
        %s319 = smul.addr %s318, 8
        %s320 = scalar_lea.vmem [#allocation4], %s319
        %p321 = scmp.lt.s32.totalorder %s23, 1
        %s322 = scalar_select %p321, %s23, 1
        %s323 = smul.addr %s322, 8
        %s324 = scalar_lea.vmem %s0, %s323
        %p325 = scmp.lt.s32.totalorder %s24, 1
        %s326 = scalar_select %p325, %s24, 1
        %s327 = scalar_lea.vmem %s2, %s326
        %s328 = smul.u32 16, %s24
        %p329 = scmp.lt.s32.totalorder %s328, 31
        %s330 = scalar_select %p329, %s328, 31
        %s331 = smul.addr %s330, 8
        %s332 = scalar_lea.vmem %s3, %s331
        %s333 = smul.u32 16, %s24
        %p334 = scmp.eq.s32.totalorder %s24, 0
        // Predicated region
        $region79: #{tpu_custom_call.1} parent=73 // pred_check
          %p335 = pneg %p334
        $region80: #{tpu_custom_call.1} parent=73 // pred_check_branch
          %337 = sbr.rel (%p335) target = $region82
        $region81: #{tpu_custom_call.1} parent=73 // pred_region
          %v338 = vld [vmem:[%s4] sm:$0x1]
          %v340 = vlaneseq
          %v341 = vshrl.u32 %v340, 7
          %v342 = vsub.s32 0, %v341
          %v343 = vrot.slane %v338, %v342
          %vm345 = vcmask 261120
          %346 = vst.msk [vmem:[#allocation2] sm:$0xff] %vm345, %v343
        $region82: #{tpu_custom_call.1} parent=73 // pred_fallthru
          _
        %v347 = vld [vmem:[%s324] sm:$0xff]
        %v348 = vld [vmem:[%s284] sm:$0xff]
        %v349 = vld [vmem:[%s284 + $0x8] sm:$0xff]
        %v350 = vld [vmem:[%s284 + $0x10] sm:$0xff]
        %v351 = vld [vmem:[%s284 + $0x18] sm:$0xff]
        %v352 = vld [vmem:[%s327] sm:$0x1]
        %v354 = vlaneseq
        %v355 = vshrl.u32 %v354, 7
        %v356 = vsub.s32 0, %v355
        %v357 = vrot.slane %v352, %v356
        %vm359 = vcmask 261120
        %v361 = vsel %vm359, %v347, 0
        %363 = vmatprep.subr.mxu0 0.0
        %364 = vmatpush1.msra.mxu0 %v348
        %365 = vmatprep.subr.mxu0 0.0
        %366 = vmatpush1.msra.mxu0 %v349
        %367 = vmatprep.subr.mxu0 0.0
        %368 = vmatpush1.msra.mxu0 %v350
        %369 = vmatprep.subr.mxu0 0.0
        %370 = vmatpush1.msra.mxu0 %v351
        %371 = vmatprep.subr.mxu0 0.0
        %372 = vmatpush1.msra.mxu0 0.0
        %373 = vmatprep.subr.mxu0 0.0
        %374 = vmatpush1.msra.mxu0 0.0
        %375 = vmatprep.subr.mxu0 0.0
        %376 = vmatpush1.msra.mxu0 0.0
        %377 = vmatprep.subr.mxu0 0.0
        %378 = vmatpush1.msra.mxu0 0.0
        %379 = vmatprep.subr.mxu0 0.0
        %380 = vmatpush1.msra.mxu0 0.0
        %381 = vmatprep.subr.mxu0 0.0
        %382 = vmatpush1.msra.mxu0 0.0
        %383 = vmatprep.subr.mxu0 0.0
        %384 = vmatpush1.msra.mxu0 0.0
        %385 = vmatprep.subr.mxu0 0.0
        %386 = vmatpush1.msra.mxu0 0.0
        %387 = vmatprep.subr.mxu0 0.0
        %388 = vmatpush1.msra.mxu0 0.0
        %389 = vmatprep.subr.mxu0 0.0
        %390 = vmatpush1.msra.mxu0 0.0
        %391 = vmatprep.subr.mxu0 0.0
        %392 = vmatpush1.msra.mxu0 0.0
        %393 = vmatprep.subr.mxu0 0.0
        %394 = vmatpush1.msra.mxu0 0.0
        %395 = vmatprep.subr.mxu0 0.0
        %396 = vmatpush1.msra.mxu0 0.0
        %397 = vmatprep.subr.mxu0 0.0
        %398 = vmatpush1.msra.mxu0 0.0
        %399 = vmatprep.subr.mxu0 0.0
        %400 = vmatpush1.msra.mxu0 0.0
        %401 = vmatprep.subr.mxu0 0.0
        %402 = vmatpush1.msra.mxu0 0.0
        %403 = vmatprep.subr.mxu0 0.0
        %404 = vmatpush1.msra.mxu0 0.0
        %405 = vmatprep.subr.mxu0 0.0
        %406 = vmatpush1.msra.mxu0 0.0
        %407 = vmatprep.subr.mxu0 0.0
        %408 = vmatpush1.msra.mxu0 0.0
        %409 = vmatprep.subr.mxu0 0.0
        %410 = vmatpush1.msra.mxu0 0.0
        %411 = vmatprep.subr.mxu0 0.0
        %412 = vmatpush1.msra.mxu0 0.0
        %413 = vmatprep.subr.mxu0 0.0
        %414 = vmatpush1.msra.mxu0 0.0
        %415 = vmatprep.subr.mxu0 0.0
        %416 = vmatpush1.msra.mxu0 0.0
        %417 = vmatprep.subr.mxu0 0.0
        %418 = vmatpush1.msra.mxu0 0.0
        %419 = vmatprep.subr.mxu0 0.0
        %420 = vmatpush1.msra.mxu0 0.0
        %421 = vmatprep.subr.mxu0 0.0
        %422 = vmatpush1.msra.mxu0 0.0
        %423 = vmatprep.subr.mxu0 0.0
        %424 = vmatpush1.msra.mxu0 0.0
        %425 = vmatprep.subr.mxu0 0.0
        %426 = vmatpush1.msra.mxu0 0.0
        %427 = vmatprep.mubr.f32.mxu0 0.0
        %428 = vmatmul.mubr.f32.gmra.mrb[0].mxu0 %v361
        %v429 = vpop.f32.mrb[0].mxu0
        %v430 = vadd.f32 %v357, %v429
        %v431 = vpop.f32.mrb[0].mxu0
        %432 = vdwg.mxu0
        %v433 = vmax.f32 %v430, 0.0
        %v434 = vld [vmem:[#allocation2] sm:$0xff]
        %v435 = vld [vmem:[%s332] sm:$0xff]
        %v436 = vld [vmem:[%s332 + $0x8] sm:$0xff]
        %v437 = vld [vmem:[%s332 + $0x10] sm:$0xff]
        %v438 = vld [vmem:[%s332 + $0x18] sm:$0xff]
        %v439 = vld [vmem:[%s332 + $0x20] sm:$0xff]
        %v440 = vld [vmem:[%s332 + $0x28] sm:$0xff]
        %v441 = vld [vmem:[%s332 + $0x30] sm:$0xff]
        %v442 = vld [vmem:[%s332 + $0x38] sm:$0xff]
        %v443 = vld [vmem:[%s332 + $0x40] sm:$0xff]
        %v444 = vld [vmem:[%s332 + $0x48] sm:$0xff]
        %v445 = vld [vmem:[%s332 + $0x50] sm:$0xff]
        %v446 = vld [vmem:[%s332 + $0x58] sm:$0xff]
        %v447 = vld [vmem:[%s332 + $0x60] sm:$0xff]
        %v448 = vld [vmem:[%s332 + $0x68] sm:$0xff]
        %v449 = vld [vmem:[%s332 + $0x70] sm:$0xff]
        %v450 = vld [vmem:[%s332 + $0x78] sm:$0xff]
        %451 = vmatprep.subr.mxu0 0.0
        %452 = vmatpush1.msra.mxu0 %v435
        %453 = vmatprep.subr.mxu0 0.0
        %454 = vmatpush1.msra.mxu0 %v436
        %455 = vmatprep.subr.mxu0 0.0
        %456 = vmatpush1.msra.mxu0 %v437
        %457 = vmatprep.subr.mxu0 0.0
        %458 = vmatpush1.msra.mxu0 %v438
        %459 = vmatprep.subr.mxu0 0.0
        %460 = vmatpush1.msra.mxu0 %v439
        %461 = vmatprep.subr.mxu0 0.0
        %462 = vmatpush1.msra.mxu0 %v440
        %463 = vmatprep.subr.mxu0 0.0
        %464 = vmatpush1.msra.mxu0 %v441
        %465 = vmatprep.subr.mxu0 0.0
        %466 = vmatpush1.msra.mxu0 %v442
        %467 = vmatprep.subr.mxu0 0.0
        %468 = vmatpush1.msra.mxu0 %v443
        %469 = vmatprep.subr.mxu0 0.0
        %470 = vmatpush1.msra.mxu0 %v444
        %471 = vmatprep.subr.mxu0 0.0
        %472 = vmatpush1.msra.mxu0 %v445
        %473 = vmatprep.subr.mxu0 0.0
        %474 = vmatpush1.msra.mxu0 %v446
        %475 = vmatprep.subr.mxu0 0.0
        %476 = vmatpush1.msra.mxu0 %v447
        %477 = vmatprep.subr.mxu0 0.0
        %478 = vmatpush1.msra.mxu0 %v448
        %479 = vmatprep.subr.mxu0 0.0
        %480 = vmatpush1.msra.mxu0 %v449
        %481 = vmatprep.subr.mxu0 0.0
        %482 = vmatpush1.msra.mxu0 %v450
        %483 = vmatprep.subr.mxu0 0.0
        %484 = vmatpush1.msra.mxu0 0.0
        %485 = vmatprep.subr.mxu0 0.0
        %486 = vmatpush1.msra.mxu0 0.0
        %487 = vmatprep.subr.mxu0 0.0
        %488 = vmatpush1.msra.mxu0 0.0
        %489 = vmatprep.subr.mxu0 0.0
        %490 = vmatpush1.msra.mxu0 0.0
        %491 = vmatprep.subr.mxu0 0.0
        %492 = vmatpush1.msra.mxu0 0.0
        %493 = vmatprep.subr.mxu0 0.0
        %494 = vmatpush1.msra.mxu0 0.0
        %495 = vmatprep.subr.mxu0 0.0
        %496 = vmatpush1.msra.mxu0 0.0
        %497 = vmatprep.subr.mxu0 0.0
        %498 = vmatpush1.msra.mxu0 0.0
        %499 = vmatprep.subr.mxu0 0.0
        %500 = vmatpush1.msra.mxu0 0.0
        %501 = vmatprep.subr.mxu0 0.0
        %502 = vmatpush1.msra.mxu0 0.0
        %503 = vmatprep.subr.mxu0 0.0
        %504 = vmatpush1.msra.mxu0 0.0
        %505 = vmatprep.subr.mxu0 0.0
        %506 = vmatpush1.msra.mxu0 0.0
        %507 = vmatprep.subr.mxu0 0.0
        %508 = vmatpush1.msra.mxu0 0.0
        %509 = vmatprep.subr.mxu0 0.0
        %510 = vmatpush1.msra.mxu0 0.0
        %511 = vmatprep.subr.mxu0 0.0
        %512 = vmatpush1.msra.mxu0 0.0
        %513 = vmatprep.subr.mxu0 0.0
        %514 = vmatpush1.msra.mxu0 0.0
        %515 = vmatprep.mubr.f32.mxu0 0.0
        %516 = vmatmul.mubr.f32.gmra.mrb[0].mxu0 %v433
        %v517 = vpop.f32.mrb[0].mxu0
        %v518 = vadd.f32 0.0, %v517
        %v519 = vpop.f32.mrb[0].mxu0
        %520 = vdwg.mxu0
        %v521 = vadd.f32 %v434, %v518
        %522 = vst.msk [vmem:[#allocation2] sm:$0xff] %vm359, %v521
        %p523 = scmp.eq.s32.totalorder %s24, 1
        // Predicated region
        $region83: #{tpu_custom_call.1} parent=73 // pred_check
          %p524 = pneg %p523
        $region84: #{tpu_custom_call.1} parent=73 // pred_check_branch
          %526 = sbr.rel (%p524) target = $region86
        $region85: #{tpu_custom_call.1} parent=73 // pred_region
          %v527 = vld [vmem:[#allocation2] sm:$0xff]
          %528 = vst.msk [vmem:[%s320] sm:$0xff] %vm359, %v527
        $region86: #{tpu_custom_call.1} parent=73 // pred_fallthru
          _
        %s529 = sand.u32 %s164, 1
        %s530 = scalar_lea.sflag [#allocation5], %s529
        %s531 = sand.u32 %s164, 1
        %s532 = smul.addr %s531, 8
        %s533 = scalar_lea.vmem [#allocation4], %s532
        // Predicated region
        $region87: #{tpu_custom_call.1} parent=73 // pred_check
          %p534 = pneg %p174
        $region88: #{tpu_custom_call.1} parent=73 // pred_check_branch
          %536 = sbr.rel (%p534) target = $region90
        $region89: #{tpu_custom_call.1} parent=73 // pred_region
          %s538 = ssub.s32 128, 128
          %539 = vsyncadd %s530, %s538
          %s540 = smul.addr %s23, 128
          %s541 = scalar_lea.hbm %s5, %s540
          %s543 = sshll.u32 %s533, 4
          %s544 = int_to_ptr.vmem [resolvable:$true] %s543
          %546 = dma.vmem_to_hbm [thread:$0]  %s544, 128, %s541, %s530
        $region90: #{tpu_custom_call.1} parent=73 // pred_fallthru
          _
      $region74: #{tpu_custom_call.1} parent=5 // pred_fallthru
        _
      %p547 = scmp.le.s32.totalorder 2, %s14
      // Predicated region
      $region91: #{tpu_custom_call.1} parent=5 // pred_check
        %p548 = pneg %p547
      $region92: #{tpu_custom_call.1} parent=5 // pred_check_branch
        %550 = sbr.rel (%p548) target = $region94
      $region93: #{tpu_custom_call.1} parent=5 // pred_region
        %s551 = ssub.s32 %s14, 2
        // Predicated region
        $region95: #{tpu_custom_call.1} parent=93 // pred_check
          %p552 = pneg %p180
        $region96: #{tpu_custom_call.1} parent=93 // pred_check_branch
          %554 = sbr.rel (%p552) target = $region98
        $region97: #{tpu_custom_call.1} parent=93 // pred_region
          %s555 = sand.u32 %s165, 1
          %s556 = scalar_lea.sflag [#allocation5], %s555
          %s557 = sand.u32 %s165, 1
          %s558 = smul.addr %s557, 8
          %s559 = scalar_lea.vmem [#allocation4], %s558
          %560 = dma.done %s556, 128
        $region98: #{tpu_custom_call.1} parent=93 // pred_fallthru
          _
      $region94: #{tpu_custom_call.1} parent=5 // pred_fallthru
        _
    $region6: #{tpu_custom_call.1} parent=1 // loop_footer
      %s18 = sadd.s32 1, %s14
    $region7: #{tpu_custom_call.1} parent=1 // loop_footer_branch
      %13 = sbr.rel target = $region3
    $region8: #{tpu_custom_call.1} parent=1 // loop_exit
      _
    %561 = vsyncpa [#allocation5], 1
    %s562 = scalar_lea.sflag [#allocation5], 1
    %563 = vsyncpa %s562, 1

</llo_original>
